<compile_context>
chip_gen: v7x
topology: tpu7x:2x2x1
jax: 0.10.0
libtpu: 0.0.40
codegen_flags: <defaults>
</compile_context>

<pallas_src>
import jax
import jax.numpy as jnp
import numpy as np
from jax import lax
from jax.experimental import pallas as pl
from jax.experimental.pallas import tpu as pltpu


def se_block_kernel(x_ref, w_ref, o_ref):
    """x_ref, o_ref: (B, C, HW).  w_ref: (2, Cr, C) = [W1_pt, W2_pt^T].

    W1_pt (Cr, C): first Linear weight  ->  h = relu(W1_pt @ y_col)
    W2_pt (C, Cr): second Linear weight ->  s = sigmoid(W2_pt @ h)
    (w_ref[1] holds W2_pt transposed so both slabs are lane-dense; the
     contraction over Cr is expressed via lax.dot_general.)
    """
    B = x_ref.shape[0]
    w1 = w_ref[0]                    # (Cr, C)  == W1_pt
    w2t = w_ref[1]                   # (Cr, C)  == W2_pt^T

    # --- squeeze: per-batch spatial mean, kept channel-on-sublane as (C, 1)
    #     columns and gathered into Y = (C, B), so the excitation matmuls are
    #     batched over B (one pair of dots instead of per-batch M=1 dots). ---
    y = jnp.concatenate(
        [jnp.mean(x_ref[b], axis=-1, keepdims=True) for b in range(B)],
        axis=-1)                                                     # (C, B)

    # --- excitation: Linear -> ReLU -> Linear -> Sigmoid, all in column
    #     orientation so the gate is produced directly as (C, B). ---
    h = jnp.maximum(
        jnp.dot(w1, y, preferred_element_type=jnp.float32), 0.0)    # (Cr, B)
    s = lax.dot_general(                                            # W2_pt @ h
        w2t, h,
        dimension_numbers=(((0,), (0,)), ((), ())),                 # contract Cr
        preferred_element_type=jnp.float32)                         # (C, B)
    s = jax.nn.sigmoid(s).astype(o_ref.dtype)

    # --- scale: broadcast each per-channel gate column over the lane-dense
    #     spatial axis (HW is a multiple of 128 -> unmasked full stores). ---
    for b in range(B):
        o_ref[b] = x_ref[b] * s[:, b:b + 1]                         # (C,HW)*(C,1)


def se_block(x, w1, w2):
    """SEBlock forward.

    x : (B, C, H, W) float32
    w1: (C, C//r)  -- first Linear in `y @ w1` convention (= W1_pt^T)
    w2: (C//r, C)  -- second Linear in `h @ w2` convention (= W2_pt^T)
    """
    B, C, H, W = x.shape
    HW = H * W
    Cr = w1.shape[1]
    x_flat = x.reshape(B, C, HW)                      # spatial last, lane-dense

    # Lane-dense weight packing: both (Cr, C) slabs in one array -> one DMA,
    # ~8 KiB padded VMEM instead of ~36 KiB for the (C,Cr)/(Cr,C) pair.
    w_packed = jnp.stack([w1.T, w2], axis=0)          # (2, Cr, C)

    itemsize = jnp.dtype(x.dtype).itemsize
    cost = pl.CostEstimate(
        flops=2 * B * C * HW + 4 * B * C * Cr,        # pool + scale + 2 tiny dots
        transcendentals=B * C,                        # sigmoid
        bytes_accessed=2 * B * C * HW * itemsize + 2 * Cr * C * 4,
    )

    # Single grid step: whole problem is one block, so per-step overhead is
    # paid once.  (For v7x at larger batch, split over B with "parallel"
    # semantics so both TensorCores get work; on v5e/v6e one block is best.)
    out_flat = pl.pallas_call(
        se_block_kernel,
        out_shape=jax.ShapeDtypeStruct((B, C, HW), x.dtype),
        grid=(1,),
        in_specs=[
            pl.BlockSpec((B, C, HW), lambda i: (0, 0, 0)),
            pl.BlockSpec((2, Cr, C), lambda i: (0, 0, 0)),
        ],
        out_specs=pl.BlockSpec((B, C, HW), lambda i: (0, 0, 0)),
        compiler_params=pltpu.CompilerParams(
            dimension_semantics=("arbitrary",)),
        cost_estimate=cost,
        # NOTE: input_output_aliases={0: 0} would save the second HBM buffer,
        # but only if the caller donates x; left off so x stays readable.
    )(x_flat, w_packed)

    return out_flat.reshape(B, C, H, W)


def se_block_reference(x, w1, w2):
    y = jnp.mean(x, axis=(2, 3))                      # (B, C)
    y = jnp.maximum(y @ w1, 0.0)                      # (B, C//r)
    y = jax.nn.sigmoid(y @ w2)                        # (B, C)
    return x * y[:, :, None, None]


if __name__ == "__main__":
    B, C, H, W = 2, 64, 16, 16
    r = 16
    Cr = C // r

    key = jax.random.PRNGKey(0)
    kx, k1, k2 = jax.random.split(key, 3)

    x = jax.random.normal(kx, (B, C, H, W), dtype=jnp.float32)
    # PyTorch Linear stores (out, in); here we keep the transposed "y @ W"
    # convention: w1 is (C, C//r), w2 is (C//r, C).
    w1 = jax.random.normal(k1, (C, Cr), dtype=jnp.float32) * (1.0 / np.sqrt(C))
    w2 = jax.random.normal(k2, (Cr, C), dtype=jnp.float32) * (1.0 / np.sqrt(Cr))

    out = se_block(x, w1, w2)
    out = jax.block_until_ready(out)

    ref = se_block_reference(x, w1, w2)
    np.testing.assert_allclose(np.asarray(out), np.asarray(ref),
                               rtol=1e-5, atol=1e-5)
    print("KERNEL_OK")
</pallas_src>

<mosaic_0001>
module attributes {stable_mosaic.version = 11 : i64} {
  func.func @se_block_kernel(%arg0: i32, %arg1: memref<2x64x256xf32, #tpu.memory_space<vmem>>, %arg2: memref<2x4x64xf32, #tpu.memory_space<vmem>>, %arg3: memref<2x64x256xf32, #tpu.memory_space<vmem>>) attributes {dimension_semantics = [#tpu.dimension_semantics<arbitrary>], iteration_bounds = array<i64: 1>, scalar_prefetch = 0 : i64, scratch_operands = 0 : i64, tpu.core_type = #tpu.core_type<tc>, window_params = [{pipeline_mode = #tpu.pipeline_mode<synchronous>, transform_indices = @transform_0, window_bounds = array<i64: 2, 64, 256>}, {pipeline_mode = #tpu.pipeline_mode<synchronous>, transform_indices = @transform_1, window_bounds = array<i64: 2, 4, 64>}, {pipeline_mode = #tpu.pipeline_mode<synchronous>, transform_indices = @transform_2, window_bounds = array<i64: 2, 64, 256>}]} {
    %c0 = arith.constant 0 : index
    %c0_0 = arith.constant 0 : index
    %c0_1 = arith.constant 0 : index
    %0 = vector.load %arg2[%c0, %c0_0, %c0_1] : memref<2x4x64xf32, #tpu.memory_space<vmem>>, vector<1x4x64xf32>
    %1 = vector.shape_cast %0 : vector<1x4x64xf32> to vector<4x64xf32>
    %c1 = arith.constant 1 : index
    %c0_2 = arith.constant 0 : index
    %c0_3 = arith.constant 0 : index
    %2 = vector.load %arg2[%c1, %c0_2, %c0_3] : memref<2x4x64xf32, #tpu.memory_space<vmem>>, vector<1x4x64xf32>
    %3 = vector.shape_cast %2 : vector<1x4x64xf32> to vector<4x64xf32>
    %c0_4 = arith.constant 0 : index
    %c0_5 = arith.constant 0 : index
    %c0_6 = arith.constant 0 : index
    %4 = vector.load %arg1[%c0_4, %c0_5, %c0_6] : memref<2x64x256xf32, #tpu.memory_space<vmem>>, vector<1x64x256xf32>
    %5 = vector.shape_cast %4 : vector<1x64x256xf32> to vector<64x256xf32>
    %cst = arith.constant dense<0.000000e+00> : vector<64xf32>
    %6 = vector.multi_reduction <add>, %5, %cst [1] : vector<64x256xf32> to vector<64xf32>
    %7 = vector.shape_cast %6 : vector<64xf32> to vector<64x1xf32>
    %cst_7 = arith.constant 2.560000e+02 : f32
    %8 = vector.broadcast %cst_7 : f32 to vector<64x1xf32>
    %9 = arith.divf %7, %8 : vector<64x1xf32>
    %c1_8 = arith.constant 1 : index
    %c0_9 = arith.constant 0 : index
    %c0_10 = arith.constant 0 : index
    %10 = vector.load %arg1[%c1_8, %c0_9, %c0_10] : memref<2x64x256xf32, #tpu.memory_space<vmem>>, vector<1x64x256xf32>
    %11 = vector.shape_cast %10 : vector<1x64x256xf32> to vector<64x256xf32>
    %cst_11 = arith.constant dense<0.000000e+00> : vector<64xf32>
    %12 = vector.multi_reduction <add>, %11, %cst_11 [1] : vector<64x256xf32> to vector<64xf32>
    %13 = vector.shape_cast %12 : vector<64xf32> to vector<64x1xf32>
    %cst_12 = arith.constant 2.560000e+02 : f32
    %14 = vector.broadcast %cst_12 : f32 to vector<64x1xf32>
    %15 = arith.divf %13, %14 : vector<64x1xf32>
    %16 = tpu.concatenate %9, %15 in 1 : vector<64x1xf32>, vector<64x1xf32> -> vector<64x2xf32>
    %cst_13 = arith.constant dense<0.000000e+00> : vector<4x2xf32>
    %17 = tpu.matmul %1, %16, %cst_13 {dimension_numbers = #tpu.dot_dimension_numbers<[1], [0], [0], [1], [0, 0, 1, 1], [], []>} : vector<4x64xf32>, vector<64x2xf32>, vector<4x2xf32> -> vector<4x2xf32>
    %cst_14 = arith.constant 0.000000e+00 : f32
    %18 = vector.broadcast %cst_14 : f32 to vector<4x2xf32>
    %19 = arith.maximumf %17, %18 : vector<4x2xf32>
    %cst_15 = arith.constant dense<0.000000e+00> : vector<64x2xf32>
    %20 = tpu.matmul %3, %19, %cst_15 {dimension_numbers = #tpu.dot_dimension_numbers<[0], [0], [1], [1], [0, 1, 1, 1], [], []>} : vector<4x64xf32>, vector<4x2xf32>, vector<64x2xf32> -> vector<64x2xf32>
    %21 = arith.negf %20 : vector<64x2xf32>
    %22 = math.exp %21 : vector<64x2xf32>
    %cst_16 = arith.constant 1.000000e+00 : f32
    %23 = vector.broadcast %cst_16 : f32 to vector<64x2xf32>
    %24 = arith.addf %23, %22 : vector<64x2xf32>
    %25 = arith.divf %23, %24 : vector<64x2xf32>
    %c0_17 = arith.constant 0 : index
    %c0_18 = arith.constant 0 : index
    %c0_19 = arith.constant 0 : index
    %26 = vector.load %arg1[%c0_17, %c0_18, %c0_19] : memref<2x64x256xf32, #tpu.memory_space<vmem>>, vector<1x64x256xf32>
    %27 = vector.shape_cast %26 : vector<1x64x256xf32> to vector<64x256xf32>
    %28 = vector.extract_strided_slice %25 {offsets = [0, 0], sizes = [64, 1], strides = [1, 1]} : vector<64x2xf32> to vector<64x1xf32>
    %29 = vector.broadcast %28 : vector<64x1xf32> to vector<64x256xf32>
    %30 = arith.mulf %27, %29 : vector<64x256xf32>
    %c0_20 = arith.constant 0 : index
    %c0_21 = arith.constant 0 : index
    %c0_22 = arith.constant 0 : index
    %31 = vector.load %arg3[%c0_20, %c0_21, %c0_22] : memref<2x64x256xf32, #tpu.memory_space<vmem>>, vector<1x64x256xf32>
    %32 = vector.shape_cast %31 : vector<1x64x256xf32> to vector<64x256xf32>
    %33 = vector.shape_cast %30 : vector<64x256xf32> to vector<1x64x256xf32>
    tpu.vector_store %arg3[%c0_20, %c0_21, %c0_22], %33 {strides = array<i32>} : memref<2x64x256xf32, #tpu.memory_space<vmem>>, vector<1x64x256xf32>,
    %c1_23 = arith.constant 1 : index
    %c0_24 = arith.constant 0 : index
    %c0_25 = arith.constant 0 : index
    %34 = vector.load %arg1[%c1_23, %c0_24, %c0_25] : memref<2x64x256xf32, #tpu.memory_space<vmem>>, vector<1x64x256xf32>
    %35 = vector.shape_cast %34 : vector<1x64x256xf32> to vector<64x256xf32>
    %36 = vector.extract_strided_slice %25 {offsets = [0, 1], sizes = [64, 1], strides = [1, 1]} : vector<64x2xf32> to vector<64x1xf32>
    %37 = vector.broadcast %36 : vector<64x1xf32> to vector<64x256xf32>
    %38 = arith.mulf %35, %37 : vector<64x256xf32>
    %c1_26 = arith.constant 1 : index
    %c0_27 = arith.constant 0 : index
    %c0_28 = arith.constant 0 : index
    %39 = vector.load %arg3[%c1_26, %c0_27, %c0_28] : memref<2x64x256xf32, #tpu.memory_space<vmem>>, vector<1x64x256xf32>
    %40 = vector.shape_cast %39 : vector<1x64x256xf32> to vector<64x256xf32>
    %41 = vector.shape_cast %38 : vector<64x256xf32> to vector<1x64x256xf32>
    tpu.vector_store %arg3[%c1_26, %c0_27, %c0_28], %41 {strides = array<i32>} : memref<2x64x256xf32, #tpu.memory_space<vmem>>, vector<1x64x256xf32>,
    return
  }
  func.func @transform_0(%arg0: i32) -> (i32, i32, i32) {
    %c0_i32 = arith.constant 0 : i32
    %c0_i32_0 = arith.constant 0 : i32
    %c0_i32_1 = arith.constant 0 : i32
    %c0_i32_2 = arith.constant 0 : i32
    return %c0_i32, %c0_i32_0, %c0_i32_1 : i32, i32, i32
  }
  func.func @transform_1(%arg0: i32) -> (i32, i32, i32) {
    %c0_i32 = arith.constant 0 : i32
    %c0_i32_0 = arith.constant 0 : i32
    %c0_i32_1 = arith.constant 0 : i32
    %c0_i32_2 = arith.constant 0 : i32
    return %c0_i32, %c0_i32_0, %c0_i32_1 : i32, i32, i32
  }
  func.func @transform_2(%arg0: i32) -> (i32, i32, i32) {
    %c0_i32 = arith.constant 0 : i32
    %c0_i32_0 = arith.constant 0 : i32
    %c0_i32_1 = arith.constant 0 : i32
    %c0_i32_2 = arith.constant 0 : i32
    return %c0_i32, %c0_i32_0, %c0_i32_1 : i32, i32, i32
  }
}

</mosaic_0001>

<llo_original>
// kernel: tpu_custom_call.1
$region0: #{tpu_custom_call.1}
  #allocation0 [shape = 'u32[]', space=smem, size = 0x4, offset = 0x4, fixed_abs, tag = 'smem constant byte address 0x4 - core index']
  #allocation1 [shape = 'u32[144,128]{1,0:T(1,128)}', space=vmem, size = 0x12000, scoped, tag = 'internal scratch']
  %s0 = inlined_call_operand.hbm [shape: f32[2,64,256], index: 0, kind: input, shape index: {}]
  %s1 = inlined_call_operand.hbm [shape: f32[2,4,64], index: 1, kind: input, shape index: {}]
  %s2 = inlined_call_operand.hbm [shape: f32[2,64,256], index: 2, kind: output, shape index: {}]
  %s3 = sld [smem:[#allocation0]]
  $region26: #{tpu_custom_call.1} parent=0
    _
  %s5 = ssub.s32 1, %s3
  %s6 = scalar_select 0, %s5, %s3
  $region1: #{tpu_custom_call.1} parent=0
    #allocation2 [shape = 'u8[131072]{0}', space=vmem, size = 0x20000, scoped, tag = 'input window, operand 0, single buffered']
    #allocation3 [shape = 's32[1]{0}', space=sflag, size = 0x4, scoped, tag = 'scoped memory for tpu_custom_call.1']
    #allocation4 [shape = 's32[1]{0}', space=sflag, size = 0x4, scoped, tag = 'scoped memory for tpu_custom_call.1']
    #allocation5 [shape = 'u8[4096]{0}', space=vmem, size = 0x1000, scoped, tag = 'input window, operand 1, single buffered']
    #allocation6 [shape = 's32[1]{0}', space=sflag, size = 0x4, scoped, tag = 'scoped memory for tpu_custom_call.1']
    #allocation7 [shape = 'u8[131072]{0}', space=vmem, size = 0x20000, scoped, tag = 'output window, operand 0, single buffered']
    %7 = vsyncpa [#allocation3], 0
    %8 = vsyncpa [#allocation6], 0
    %9 = vsyncpa [#allocation4], 0
    // Predicated region
    $region2: #{tpu_custom_call.1} parent=1 // pred_check
      _
    $region3: #{tpu_custom_call.1} parent=1 // pred_check_branch
      %11 = sbr.rel (0) target = $region5
    $region4: #{tpu_custom_call.1} parent=1 // pred_region
      %s13 = ssub.s32 4096, 4096
      %14 = vsyncadd [#allocation3], %s13
      %s15 = sshll.u32 [#allocation2], 4
      %s16 = int_to_ptr.vmem [resolvable:$true] %s15
      %21 = dma.hbm_to_vmem [thread:$0]  %s0, 4096, %s16, [#allocation3], 256, 256, 16
    $region5: #{tpu_custom_call.1} parent=1 // pred_fallthru
      _
    // Predicated region
    $region6: #{tpu_custom_call.1} parent=1 // pred_check
      _
    $region7: #{tpu_custom_call.1} parent=1 // pred_check_branch
      %23 = sbr.rel (0) target = $region9
    $region8: #{tpu_custom_call.1} parent=1 // pred_region
      %s25 = ssub.s32 128, 128
      %26 = vsyncadd [#allocation6], %s25
      %s27 = sshll.u32 [#allocation5], 4
      %s28 = int_to_ptr.vmem [resolvable:$true] %s27
      %33 = dma.hbm_to_vmem [thread:$0]  %s1, 128, %s28, [#allocation6], 64, 64, 4
    $region9: #{tpu_custom_call.1} parent=1 // pred_fallthru
      _
    // Predicated region
    $region10: #{tpu_custom_call.1} parent=1 // pred_check
      _
    $region11: #{tpu_custom_call.1} parent=1 // pred_check_branch
      %35 = sbr.rel (0) target = $region13
    $region12: #{tpu_custom_call.1} parent=1 // pred_region
      %36 = dma.done [#allocation3], 4096
    $region13: #{tpu_custom_call.1} parent=1 // pred_fallthru
      _
    // Predicated region
    $region14: #{tpu_custom_call.1} parent=1 // pred_check
      _
    $region15: #{tpu_custom_call.1} parent=1 // pred_check_branch
      %38 = sbr.rel (0) target = $region17
    $region16: #{tpu_custom_call.1} parent=1 // pred_region
      %39 = dma.done [#allocation6], 128
    $region17: #{tpu_custom_call.1} parent=1 // pred_fallthru
      _
    %v40 = vld [vmem:[#allocation5] sm:$0xf]
    %s41 = scalar_lea.vmem [#allocation5], 4
    %v42 = vld [vmem:[%s41] sm:$0xf]
    %v43 = vld [vmem:[#allocation2] sm:$0xff]
    %v44 = vld [vmem:[#allocation2 + $0x8] sm:$0xff]
    %v45 = vld [vmem:[#allocation2 + $0x10] sm:$0xff]
    %v46 = vld [vmem:[#allocation2 + $0x18] sm:$0xff]
    %v47 = vld [vmem:[#allocation2 + $0x20] sm:$0xff]
    %v48 = vld [vmem:[#allocation2 + $0x28] sm:$0xff]
    %v49 = vld [vmem:[#allocation2 + $0x30] sm:$0xff]
    %v50 = vld [vmem:[#allocation2 + $0x38] sm:$0xff]
    %v51 = vld [vmem:[#allocation2 + $0x40] sm:$0xff]
    %v52 = vld [vmem:[#allocation2 + $0x48] sm:$0xff]
    %v53 = vld [vmem:[#allocation2 + $0x50] sm:$0xff]
    %v54 = vld [vmem:[#allocation2 + $0x58] sm:$0xff]
    %v55 = vld [vmem:[#allocation2 + $0x60] sm:$0xff]
    %v56 = vld [vmem:[#allocation2 + $0x68] sm:$0xff]
    %v57 = vld [vmem:[#allocation2 + $0x70] sm:$0xff]
    %v58 = vld [vmem:[#allocation2 + $0x78] sm:$0xff]
    %v59 = vadd.f32 %v43, %v44
    %60 = vadd.xlane.f32.xlu0 %v59
    %v61 = vpop.xlane.xlu0 %60
    %v62 = vadd.f32 %v45, %v46
    %63 = vadd.xlane.f32.xlu0 %v62
    %v64 = vpop.xlane.xlu0 %63
    %v65 = vadd.f32 %v47, %v48
    %66 = vadd.xlane.f32.xlu0 %v65
    %v67 = vpop.xlane.xlu0 %66
    %v68 = vadd.f32 %v49, %v50
    %69 = vadd.xlane.f32.xlu0 %v68
    %v70 = vpop.xlane.xlu0 %69
    %v71 = vadd.f32 %v51, %v52
    %72 = vadd.xlane.f32.xlu0 %v71
    %v73 = vpop.xlane.xlu0 %72
    %v74 = vadd.f32 %v53, %v54
    %75 = vadd.xlane.f32.xlu0 %v74
    %v76 = vpop.xlane.xlu0 %75
    %v77 = vadd.f32 %v55, %v56
    %78 = vadd.xlane.f32.xlu0 %v77
    %v79 = vpop.xlane.xlu0 %78
    %v80 = vadd.f32 %v57, %v58
    %81 = vadd.xlane.f32.xlu0 %v80
    %v82 = vpop.xlane.xlu0 %81
    %v83 = vrcp.pop 256.0
    %v84 = vmul.f32 %v61, %v83
    %v85 = vmul.f32 %v64, %v83
    %v86 = vmul.f32 %v67, %v83
    %v87 = vmul.f32 %v70, %v83
    %v88 = vmul.f32 %v73, %v83
    %v89 = vmul.f32 %v76, %v83
    %v90 = vmul.f32 %v79, %v83
    %v91 = vmul.f32 %v82, %v83
    %s92 = scalar_lea.vmem [#allocation2], 128
    %v93 = vld [vmem:[%s92] sm:$0xff]
    %v94 = vld [vmem:[%s92 + $0x8] sm:$0xff]
    %v95 = vld [vmem:[%s92 + $0x10] sm:$0xff]
    %v96 = vld [vmem:[%s92 + $0x18] sm:$0xff]
    %v97 = vld [vmem:[%s92 + $0x20] sm:$0xff]
    %v98 = vld [vmem:[%s92 + $0x28] sm:$0xff]
    %v99 = vld [vmem:[%s92 + $0x30] sm:$0xff]
    %v100 = vld [vmem:[%s92 + $0x38] sm:$0xff]
    %v101 = vld [vmem:[%s92 + $0x40] sm:$0xff]
    %v102 = vld [vmem:[%s92 + $0x48] sm:$0xff]
    %v103 = vld [vmem:[%s92 + $0x50] sm:$0xff]
    %v104 = vld [vmem:[%s92 + $0x58] sm:$0xff]
    %v105 = vld [vmem:[%s92 + $0x60] sm:$0xff]
    %v106 = vld [vmem:[%s92 + $0x68] sm:$0xff]
    %v107 = vld [vmem:[%s92 + $0x70] sm:$0xff]
    %v108 = vld [vmem:[%s92 + $0x78] sm:$0xff]
    %v109 = vadd.f32 %v93, %v94
    %110 = vadd.xlane.f32.xlu0 %v109
    %v111 = vpop.xlane.xlu0 %110
    %v112 = vadd.f32 %v95, %v96
    %113 = vadd.xlane.f32.xlu0 %v112
    %v114 = vpop.xlane.xlu0 %113
    %v115 = vadd.f32 %v97, %v98
    %116 = vadd.xlane.f32.xlu0 %v115
    %v117 = vpop.xlane.xlu0 %116
    %v118 = vadd.f32 %v99, %v100
    %119 = vadd.xlane.f32.xlu0 %v118
    %v120 = vpop.xlane.xlu0 %119
    %v121 = vadd.f32 %v101, %v102
    %122 = vadd.xlane.f32.xlu0 %v121
    %v123 = vpop.xlane.xlu0 %122
    %v124 = vadd.f32 %v103, %v104
    %125 = vadd.xlane.f32.xlu0 %v124
    %v126 = vpop.xlane.xlu0 %125
    %v127 = vadd.f32 %v105, %v106
    %128 = vadd.xlane.f32.xlu0 %v127
    %v129 = vpop.xlane.xlu0 %128
    %v130 = vadd.f32 %v107, %v108
    %131 = vadd.xlane.f32.xlu0 %v130
    %v132 = vpop.xlane.xlu0 %131
    %v133 = vmul.f32 %v111, %v83
    %v134 = vmul.f32 %v114, %v83
    %v135 = vmul.f32 %v117, %v83
    %v136 = vmul.f32 %v120, %v83
    %v137 = vmul.f32 %v123, %v83
    %v138 = vmul.f32 %v126, %v83
    %v139 = vmul.f32 %v129, %v83
    %v140 = vmul.f32 %v132, %v83
    %vm141 = vcmask 7168
    %v142 = vsel %vm141, %v84, %v133
    %v143 = vsel %vm141, %v85, %v134
    %v144 = vsel %vm141, %v86, %v135
    %v145 = vsel %vm141, %v87, %v136
    %v146 = vsel %vm141, %v88, %v137
    %v147 = vsel %vm141, %v89, %v138
    %v148 = vsel %vm141, %v90, %v139
    %v149 = vsel %vm141, %v91, %v140
    %vm150 = vcmask 523264
    %v152 = vsel %vm150, %v40, 0
    %154 = vmatprep.subr.mxu0 0.0
    %155 = vmatpush1.msra.mxu0 %v142
    %156 = vmatprep.subr.mxu0 0.0
    %157 = vmatpush1.msra.mxu0 %v143
    %158 = vmatprep.subr.mxu0 0.0
    %159 = vmatpush1.msra.mxu0 %v144
    %160 = vmatprep.subr.mxu0 0.0
    %161 = vmatpush1.msra.mxu0 %v145
    %162 = vmatprep.subr.mxu0 0.0
    %163 = vmatpush1.msra.mxu0 %v146
    %164 = vmatprep.subr.mxu0 0.0
    %165 = vmatpush1.msra.mxu0 %v147
    %166 = vmatprep.subr.mxu0 0.0
    %167 = vmatpush1.msra.mxu0 %v148
    %168 = vmatprep.subr.mxu0 0.0
    %169 = vmatpush1.msra.mxu0 %v149
    %170 = vmatprep.subr.mxu0 0.0
    %171 = vmatpush1.msra.mxu0 0.0
    %172 = vmatprep.subr.mxu0 0.0
    %173 = vmatpush1.msra.mxu0 0.0
    %174 = vmatprep.subr.mxu0 0.0
    %175 = vmatpush1.msra.mxu0 0.0
    %176 = vmatprep.subr.mxu0 0.0
    %177 = vmatpush1.msra.mxu0 0.0
    %178 = vmatprep.subr.mxu0 0.0
    %179 = vmatpush1.msra.mxu0 0.0
    %180 = vmatprep.subr.mxu0 0.0
    %181 = vmatpush1.msra.mxu0 0.0
    %182 = vmatprep.subr.mxu0 0.0
    %183 = vmatpush1.msra.mxu0 0.0
    %184 = vmatprep.subr.mxu0 0.0
    %185 = vmatpush1.msra.mxu0 0.0
    %186 = vmatprep.subr.mxu0 0.0
    %187 = vmatpush1.msra.mxu0 0.0
    %188 = vmatprep.subr.mxu0 0.0
    %189 = vmatpush1.msra.mxu0 0.0
    %190 = vmatprep.subr.mxu0 0.0
    %191 = vmatpush1.msra.mxu0 0.0
    %192 = vmatprep.subr.mxu0 0.0
    %193 = vmatpush1.msra.mxu0 0.0
    %194 = vmatprep.subr.mxu0 0.0
    %195 = vmatpush1.msra.mxu0 0.0
    %196 = vmatprep.subr.mxu0 0.0
    %197 = vmatpush1.msra.mxu0 0.0
    %198 = vmatprep.subr.mxu0 0.0
    %199 = vmatpush1.msra.mxu0 0.0
    %200 = vmatprep.subr.mxu0 0.0
    %201 = vmatpush1.msra.mxu0 0.0
    %202 = vmatprep.subr.mxu0 0.0
    %203 = vmatpush1.msra.mxu0 0.0
    %204 = vmatprep.subr.mxu0 0.0
    %205 = vmatpush1.msra.mxu0 0.0
    %206 = vmatprep.subr.mxu0 0.0
    %207 = vmatpush1.msra.mxu0 0.0
    %208 = vmatprep.subr.mxu0 0.0
    %209 = vmatpush1.msra.mxu0 0.0
    %210 = vmatprep.subr.mxu0 0.0
    %211 = vmatpush1.msra.mxu0 0.0
    %212 = vmatprep.subr.mxu0 0.0
    %213 = vmatpush1.msra.mxu0 0.0
    %214 = vmatprep.subr.mxu0 0.0
    %215 = vmatpush1.msra.mxu0 0.0
    %216 = vmatprep.subr.mxu0 0.0
    %217 = vmatpush1.msra.mxu0 0.0
    %218 = vmatprep.mubr.f32.mxu0 0.0
    %219 = vmatmul.mubr.f32.gmra.mrb[0].mxu0 %v152
    %v220 = vpop.f32.mrb[0].mxu0
    %v221 = vadd.f32 0.0, %v220
    %v222 = vpop.f32.mrb[0].mxu0
    %223 = vdwg.mxu0
    %v224 = vmax.f32 %v221, 0.0
    %225 = vxpose.xlu0.b32.start [1/16] %v42, 128
    %226 = vxpose.xlu0.b32.cont [2/16] 0.0, 128
    %227 = vxpose.xlu0.b32.cont [3/16] 0.0, 128
    %228 = vxpose.xlu0.b32.cont [4/16] 0.0, 128
    %229 = vxpose.xlu0.b32.cont [5/16] 0.0, 128
    %230 = vxpose.xlu0.b32.cont [6/16] 0.0, 128
    %231 = vxpose.xlu0.b32.cont [7/16] 0.0, 128
    %232 = vxpose.xlu0.b32.cont [8/16] 0.0, 128
    %233 = vxpose.xlu0.b32.cont [9/16] 0.0, 128
    %234 = vxpose.xlu0.b32.cont [10/16] 0.0, 128
    %235 = vxpose.xlu0.b32.cont [11/16] 0.0, 128
    %236 = vxpose.xlu0.b32.cont [12/16] 0.0, 128
    %237 = vxpose.xlu0.b32.cont [13/16] 0.0, 128
    %238 = vxpose.xlu0.b32.cont [14/16] 0.0, 128
    %239 = vxpose.xlu0.b32.cont [15/16] 0.0, 128
    %240 = vxpose.xlu0.b32.end [16/16] 0.0, 128
    %v241 = vpop.trf.xlu0
    %v242 = vpop.trf.xlu0
    %v243 = vpop.trf.xlu0
    %v244 = vpop.trf.xlu0
    %v245 = vpop.trf.xlu0
    %v246 = vpop.trf.xlu0
    %v247 = vpop.trf.xlu0
    %v248 = vpop.trf.xlu0
    %v249 = vpop.trf.xlu0
    %v250 = vpop.trf.xlu0
    %v251 = vpop.trf.xlu0
    %v252 = vpop.trf.xlu0
    %v253 = vpop.trf.xlu0
    %v254 = vpop.trf.xlu0
    %v255 = vpop.trf.xlu0
    %v256 = vpop.trf.xlu0
    %vm257 = vcmask 31744
    %v259 = vsel %vm257, %v241, 0
    %v262 = vsel %vm257, %v242, 0
    %v265 = vsel %vm257, %v243, 0
    %v268 = vsel %vm257, %v244, 0
    %v271 = vsel %vm257, %v245, 0
    %v274 = vsel %vm257, %v246, 0
    %v277 = vsel %vm257, %v247, 0
    %v280 = vsel %vm257, %v248, 0
    %vm282 = vcmask 1043456
    %v284 = vsel %vm282, %v224, 0
    %286 = vmatprep.subr.mxu0 0.0
    %287 = vmatpush1.msra.mxu0 %v284
    %288 = vmatprep.subr.mxu0 0.0
    %289 = vmatpush1.msra.mxu0 0.0
    %290 = vmatprep.subr.mxu0 0.0
    %291 = vmatpush1.msra.mxu0 0.0
    %292 = vmatprep.subr.mxu0 0.0
    %293 = vmatpush1.msra.mxu0 0.0
    %294 = vmatprep.subr.mxu0 0.0
    %295 = vmatpush1.msra.mxu0 0.0
    %296 = vmatprep.subr.mxu0 0.0
    %297 = vmatpush1.msra.mxu0 0.0
    %298 = vmatprep.subr.mxu0 0.0
    %299 = vmatpush1.msra.mxu0 0.0
    %300 = vmatprep.subr.mxu0 0.0
    %301 = vmatpush1.msra.mxu0 0.0
    %302 = vmatprep.subr.mxu0 0.0
    %303 = vmatpush1.msra.mxu0 0.0
    %304 = vmatprep.subr.mxu0 0.0
    %305 = vmatpush1.msra.mxu0 0.0
    %306 = vmatprep.subr.mxu0 0.0
    %307 = vmatpush1.msra.mxu0 0.0
    %308 = vmatprep.subr.mxu0 0.0
    %309 = vmatpush1.msra.mxu0 0.0
    %310 = vmatprep.subr.mxu0 0.0
    %311 = vmatpush1.msra.mxu0 0.0
    %312 = vmatprep.subr.mxu0 0.0
    %313 = vmatpush1.msra.mxu0 0.0
    %314 = vmatprep.subr.mxu0 0.0
    %315 = vmatpush1.msra.mxu0 0.0
    %316 = vmatprep.subr.mxu0 0.0
    %317 = vmatpush1.msra.mxu0 0.0
    %318 = vmatprep.subr.mxu0 0.0
    %319 = vmatpush1.msra.mxu0 0.0
    %320 = vmatprep.subr.mxu0 0.0
    %321 = vmatpush1.msra.mxu0 0.0
    %322 = vmatprep.subr.mxu0 0.0
    %323 = vmatpush1.msra.mxu0 0.0
    %324 = vmatprep.subr.mxu0 0.0
    %325 = vmatpush1.msra.mxu0 0.0
    %326 = vmatprep.subr.mxu0 0.0
    %327 = vmatpush1.msra.mxu0 0.0
    %328 = vmatprep.subr.mxu0 0.0
    %329 = vmatpush1.msra.mxu0 0.0
    %330 = vmatprep.subr.mxu0 0.0
    %331 = vmatpush1.msra.mxu0 0.0
    %332 = vmatprep.subr.mxu0 0.0
    %333 = vmatpush1.msra.mxu0 0.0
    %334 = vmatprep.subr.mxu0 0.0
    %335 = vmatpush1.msra.mxu0 0.0
    %336 = vmatprep.subr.mxu0 0.0
    %337 = vmatpush1.msra.mxu0 0.0
    %338 = vmatprep.subr.mxu0 0.0
    %339 = vmatpush1.msra.mxu0 0.0
    %340 = vmatprep.subr.mxu0 0.0
    %341 = vmatpush1.msra.mxu0 0.0
    %342 = vmatprep.subr.mxu0 0.0
    %343 = vmatpush1.msra.mxu0 0.0
    %344 = vmatprep.subr.mxu0 0.0
    %345 = vmatpush1.msra.mxu0 0.0
    %346 = vmatprep.subr.mxu0 0.0
    %347 = vmatpush1.msra.mxu0 0.0
    %348 = vmatprep.subr.mxu0 0.0
    %349 = vmatpush1.msra.mxu0 0.0
    %350 = vmatprep.mubr.f32.mxu0 0.0
    %351 = vmatmul.mubr.f32.gmra.mrb[0].mxu0 %v259
    %v352 = vpop.f32.mrb[0].mxu0
    %v353 = vadd.f32 0.0, %v352
    %v354 = vpop.f32.mrb[0].mxu0
    %355 = vmatprep.mubr.f32.mxu0 0.0
    %356 = vmatmul.mubr.f32.gmra.mrb[0].mxu0 %v262
    %v357 = vpop.f32.mrb[0].mxu0
    %v358 = vadd.f32 0.0, %v357
    %v359 = vpop.f32.mrb[0].mxu0
    %360 = vmatprep.mubr.f32.mxu0 0.0
    %361 = vmatmul.mubr.f32.gmra.mrb[0].mxu0 %v265
    %v362 = vpop.f32.mrb[0].mxu0
    %v363 = vadd.f32 0.0, %v362
    %v364 = vpop.f32.mrb[0].mxu0
    %365 = vmatprep.mubr.f32.mxu0 0.0
    %366 = vmatmul.mubr.f32.gmra.mrb[0].mxu0 %v268
    %v367 = vpop.f32.mrb[0].mxu0
    %v368 = vadd.f32 0.0, %v367
    %v369 = vpop.f32.mrb[0].mxu0
    %370 = vmatprep.mubr.f32.mxu0 0.0
    %371 = vmatmul.mubr.f32.gmra.mrb[0].mxu0 %v271
    %v372 = vpop.f32.mrb[0].mxu0
    %v373 = vadd.f32 0.0, %v372
    %v374 = vpop.f32.mrb[0].mxu0
    %375 = vmatprep.mubr.f32.mxu0 0.0
    %376 = vmatmul.mubr.f32.gmra.mrb[0].mxu0 %v274
    %v377 = vpop.f32.mrb[0].mxu0
    %v378 = vadd.f32 0.0, %v377
    %v379 = vpop.f32.mrb[0].mxu0
    %380 = vmatprep.mubr.f32.mxu0 0.0
    %381 = vmatmul.mubr.f32.gmra.mrb[0].mxu0 %v277
    %v382 = vpop.f32.mrb[0].mxu0
    %v383 = vadd.f32 0.0, %v382
    %v384 = vpop.f32.mrb[0].mxu0
    %385 = vmatprep.mubr.f32.mxu0 0.0
    %386 = vmatmul.mubr.f32.gmra.mrb[0].mxu0 %v280
    %v387 = vpop.f32.mrb[0].mxu0
    %v388 = vadd.f32 0.0, %v387
    %v389 = vpop.f32.mrb[0].mxu0
    %390 = vdwg.mxu0
    %v391 = vxor.u32 %v353, 2147483648
    %v392 = vxor.u32 %v358, 2147483648
    %v393 = vxor.u32 %v363, 2147483648
    %v394 = vxor.u32 %v368, 2147483648
    %v395 = vxor.u32 %v373, 2147483648
    %v396 = vxor.u32 %v378, 2147483648
    %v397 = vxor.u32 %v383, 2147483648
    %v398 = vxor.u32 %v388, 2147483648
    %v399 = vmul.f32 %v391, 1.442695
    %v400 = vpow.pop %v399
    %v401 = vmul.f32 %v392, 1.442695
    %v402 = vpow.pop %v401
    %v403 = vmul.f32 %v393, 1.442695
    %v404 = vpow.pop %v403
    %v405 = vmul.f32 %v394, 1.442695
    %v406 = vpow.pop %v405
    %v407 = vmul.f32 %v395, 1.442695
    %v408 = vpow.pop %v407
    %v409 = vmul.f32 %v396, 1.442695
    %v410 = vpow.pop %v409
    %v411 = vmul.f32 %v397, 1.442695
    %v412 = vpow.pop %v411
    %v413 = vmul.f32 %v398, 1.442695
    %v414 = vpow.pop %v413
    %v415 = vadd.f32 %v400, 1.0
    %v416 = vadd.f32 %v402, 1.0
    %v417 = vadd.f32 %v404, 1.0
    %v418 = vadd.f32 %v406, 1.0
    %v419 = vadd.f32 %v408, 1.0
    %v420 = vadd.f32 %v410, 1.0
    %v421 = vadd.f32 %v412, 1.0
    %v422 = vadd.f32 %v414, 1.0
    %v423 = vrcp.pop %v415
    %v424 = vmul.f32 1.0, %v423
    %v425 = vrcp.pop %v416
    %v426 = vmul.f32 1.0, %v425
    %v427 = vrcp.pop %v417
    %v428 = vmul.f32 1.0, %v427
    %v429 = vrcp.pop %v418
    %v430 = vmul.f32 1.0, %v429
    %v431 = vrcp.pop %v419
    %v432 = vmul.f32 1.0, %v431
    %v433 = vrcp.pop %v420
    %v434 = vmul.f32 1.0, %v433
    %v435 = vrcp.pop %v421
    %v436 = vmul.f32 1.0, %v435
    %v437 = vrcp.pop %v422
    %v438 = vmul.f32 1.0, %v437
    %440 = vset.pattern.permute.xlu0 0
    %441 = vperm.xlu0 %440, %v424
    %v442 = vpop.permute.xlu0 %441
    %445 = vset.pattern.permute.xlu0 0
    %446 = vperm.xlu0 %445, %v426
    %v447 = vpop.permute.xlu0 %446
    %450 = vset.pattern.permute.xlu0 0
    %451 = vperm.xlu0 %450, %v428
    %v452 = vpop.permute.xlu0 %451
    %455 = vset.pattern.permute.xlu0 0
    %456 = vperm.xlu0 %455, %v430
    %v457 = vpop.permute.xlu0 %456
    %460 = vset.pattern.permute.xlu0 0
    %461 = vperm.xlu0 %460, %v432
    %v462 = vpop.permute.xlu0 %461
    %465 = vset.pattern.permute.xlu0 0
    %466 = vperm.xlu0 %465, %v434
    %v467 = vpop.permute.xlu0 %466
    %470 = vset.pattern.permute.xlu0 0
    %471 = vperm.xlu0 %470, %v436
    %v472 = vpop.permute.xlu0 %471
    %475 = vset.pattern.permute.xlu0 0
    %476 = vperm.xlu0 %475, %v438
    %v477 = vpop.permute.xlu0 %476
    %v479 = vmul.f32 %v43, %v442
    %v480 = vmul.f32 %v44, %v442
    %v481 = vmul.f32 %v45, %v447
    %v482 = vmul.f32 %v46, %v447
    %v483 = vmul.f32 %v47, %v452
    %v484 = vmul.f32 %v48, %v452
    %v485 = vmul.f32 %v49, %v457
    %v486 = vmul.f32 %v50, %v457
    %v487 = vmul.f32 %v51, %v462
    %v488 = vmul.f32 %v52, %v462
    %v489 = vmul.f32 %v53, %v467
    %v490 = vmul.f32 %v54, %v467
    %v491 = vmul.f32 %v55, %v472
    %v492 = vmul.f32 %v56, %v472
    %v493 = vmul.f32 %v57, %v477
    %v494 = vmul.f32 %v58, %v477
    %495 = vst [vmem:[#allocation7] sm:$0xff] %v479
    %496 = vst [vmem:[#allocation7 + $0x8] sm:$0xff] %v480
    %497 = vst [vmem:[#allocation7 + $0x10] sm:$0xff] %v481
    %498 = vst [vmem:[#allocation7 + $0x18] sm:$0xff] %v482
    %499 = vst [vmem:[#allocation7 + $0x20] sm:$0xff] %v483
    %500 = vst [vmem:[#allocation7 + $0x28] sm:$0xff] %v484
    %501 = vst [vmem:[#allocation7 + $0x30] sm:$0xff] %v485
    %502 = vst [vmem:[#allocation7 + $0x38] sm:$0xff] %v486
    %503 = vst [vmem:[#allocation7 + $0x40] sm:$0xff] %v487
    %504 = vst [vmem:[#allocation7 + $0x48] sm:$0xff] %v488
    %505 = vst [vmem:[#allocation7 + $0x50] sm:$0xff] %v489
    %506 = vst [vmem:[#allocation7 + $0x58] sm:$0xff] %v490
    %507 = vst [vmem:[#allocation7 + $0x60] sm:$0xff] %v491
    %508 = vst [vmem:[#allocation7 + $0x68] sm:$0xff] %v492
    %509 = vst [vmem:[#allocation7 + $0x70] sm:$0xff] %v493
    %510 = vst [vmem:[#allocation7 + $0x78] sm:$0xff] %v494
    %v511 = vld [vmem:[%s92] sm:$0xff]
    %v512 = vld [vmem:[%s92 + $0x8] sm:$0xff]
    %v513 = vld [vmem:[%s92 + $0x10] sm:$0xff]
    %v514 = vld [vmem:[%s92 + $0x18] sm:$0xff]
    %v515 = vld [vmem:[%s92 + $0x20] sm:$0xff]
    %v516 = vld [vmem:[%s92 + $0x28] sm:$0xff]
    %v517 = vld [vmem:[%s92 + $0x30] sm:$0xff]
    %v518 = vld [vmem:[%s92 + $0x38] sm:$0xff]
    %v519 = vld [vmem:[%s92 + $0x40] sm:$0xff]
    %v520 = vld [vmem:[%s92 + $0x48] sm:$0xff]
    %v521 = vld [vmem:[%s92 + $0x50] sm:$0xff]
    %v522 = vld [vmem:[%s92 + $0x58] sm:$0xff]
    %v523 = vld [vmem:[%s92 + $0x60] sm:$0xff]
    %v524 = vld [vmem:[%s92 + $0x68] sm:$0xff]
    %v525 = vld [vmem:[%s92 + $0x70] sm:$0xff]
    %v526 = vld [vmem:[%s92 + $0x78] sm:$0xff]
    %527 = vset.pattern.permute.xlu0 1
    %528 = vperm.xlu0 %527, %v424
    %v529 = vpop.permute.xlu0 %528
    %531 = vset.pattern.permute.xlu0 1
    %532 = vperm.xlu0 %531, %v426
    %v533 = vpop.permute.xlu0 %532
    %535 = vset.pattern.permute.xlu0 1
    %536 = vperm.xlu0 %535, %v428
    %v537 = vpop.permute.xlu0 %536
    %539 = vset.pattern.permute.xlu0 1
    %540 = vperm.xlu0 %539, %v430
    %v541 = vpop.permute.xlu0 %540
    %543 = vset.pattern.permute.xlu0 1
    %544 = vperm.xlu0 %543, %v432
    %v545 = vpop.permute.xlu0 %544
    %547 = vset.pattern.permute.xlu0 1
    %548 = vperm.xlu0 %547, %v434
    %v549 = vpop.permute.xlu0 %548
    %551 = vset.pattern.permute.xlu0 1
    %552 = vperm.xlu0 %551, %v436
    %v553 = vpop.permute.xlu0 %552
    %555 = vset.pattern.permute.xlu0 1
    %556 = vperm.xlu0 %555, %v438
    %v557 = vpop.permute.xlu0 %556
    %v559 = vmul.f32 %v511, %v529
    %v560 = vmul.f32 %v512, %v529
    %v561 = vmul.f32 %v513, %v533
    %v562 = vmul.f32 %v514, %v533
    %v563 = vmul.f32 %v515, %v537
    %v564 = vmul.f32 %v516, %v537
    %v565 = vmul.f32 %v517, %v541
    %v566 = vmul.f32 %v518, %v541
    %v567 = vmul.f32 %v519, %v545
    %v568 = vmul.f32 %v520, %v545
    %v569 = vmul.f32 %v521, %v549
    %v570 = vmul.f32 %v522, %v549
    %v571 = vmul.f32 %v523, %v553
    %v572 = vmul.f32 %v524, %v553
    %v573 = vmul.f32 %v525, %v557
    %v574 = vmul.f32 %v526, %v557
    %s575 = scalar_lea.vmem [#allocation7], 128
    %576 = vst [vmem:[%s575] sm:$0xff] %v559
    %577 = vst [vmem:[%s575 + $0x8] sm:$0xff] %v560
    %578 = vst [vmem:[%s575 + $0x10] sm:$0xff] %v561
    %579 = vst [vmem:[%s575 + $0x18] sm:$0xff] %v562
    %580 = vst [vmem:[%s575 + $0x20] sm:$0xff] %v563
    %581 = vst [vmem:[%s575 + $0x28] sm:$0xff] %v564
    %582 = vst [vmem:[%s575 + $0x30] sm:$0xff] %v565
    %583 = vst [vmem:[%s575 + $0x38] sm:$0xff] %v566
    %584 = vst [vmem:[%s575 + $0x40] sm:$0xff] %v567
    %585 = vst [vmem:[%s575 + $0x48] sm:$0xff] %v568
    %586 = vst [vmem:[%s575 + $0x50] sm:$0xff] %v569
    %587 = vst [vmem:[%s575 + $0x58] sm:$0xff] %v570
    %588 = vst [vmem:[%s575 + $0x60] sm:$0xff] %v571
    %589 = vst [vmem:[%s575 + $0x68] sm:$0xff] %v572
    %590 = vst [vmem:[%s575 + $0x70] sm:$0xff] %v573
    %591 = vst [vmem:[%s575 + $0x78] sm:$0xff] %v574
    // Predicated region
    $region18: #{tpu_custom_call.1} parent=1 // pred_check
      _
    $region19: #{tpu_custom_call.1} parent=1 // pred_check_branch
      %593 = sbr.rel (0) target = $region21
    $region20: #{tpu_custom_call.1} parent=1 // pred_region
      %s595 = ssub.s32 4096, 4096
      %596 = vsyncadd [#allocation4], %s595
      %s597 = sshll.u32 [#allocation7], 4
      %s598 = int_to_ptr.vmem [resolvable:$true] %s597
      %603 = dma.vmem_to_hbm [thread:$0]  %s598, 4096, %s2, [#allocation4], 256, 256, 16
    $region21: #{tpu_custom_call.1} parent=1 // pred_fallthru
      _
    // Predicated region
    $region22: #{tpu_custom_call.1} parent=1 // pred_check
      _
    $region23: #{tpu_custom_call.1} parent=1 // pred_check_branch
      %605 = sbr.rel (0) target = $region25
    $region24: #{tpu_custom_call.1} parent=1 // pred_region
      %606 = dma.done [#allocation4], 4096
    $region25: #{tpu_custom_call.1} parent=1 // pred_fallthru
      _
    %607 = vsyncpa [#allocation3], 1
    %608 = vsyncpa [#allocation6], 1
    %609 = vsyncpa [#allocation4], 1

</llo_original>
